<compile_context>
chip_gen: v7x
topology: tpu7x:2x2x1
jax: 0.10.0
libtpu: 0.0.40
codegen_flags: <defaults>
</compile_context>

<pallas_src>
import jax
import jax.numpy as jnp
from jax.experimental import pallas as pl
from jax.experimental.pallas import tpu as pltpu

OBS_DIM = 16
HIDDEN = 32
NUM_ACTIONS = 4
NUM_HEAD = NUM_ACTIONS + 1                 # actor logits + 1 value column
W_ROWS = OBS_DIM + HIDDEN + NUM_HEAD       # packed weight blob rows (53)
B_ROWS = 8                                 # packed bias blob rows (sublane pad)


def _ff_policy_act_kernel(x_ref, w_ref, b_ref, value_ref, action_ref, logp_ref):
    # x tile: (TM, OBS_DIM), batch on sublanes (natural row-major DMA).
    # Upcast immediately (supports bf16 inputs; v5e VPU/EUP have no bf16 path).
    x = x_ref[...].astype(jnp.float32)

    # Static slices of the packed parameter blobs (zero-cost views).
    w1 = w_ref[0:OBS_DIM, :]                               # (OBS, H)
    w2 = w_ref[OBS_DIM:OBS_DIM + HIDDEN, :]                # (H, H)
    w_head_t = w_ref[OBS_DIM + HIDDEN:W_ROWS, :]           # (A+1, H)
    b1 = b_ref[0:1, :]                                     # (1, H)
    b2 = b_ref[1:2, :]                                     # (1, H)
    b_head = b_ref[2:2 + NUM_HEAD, 0:1]                    # (A+1, 1) column

    # Trunk: 2 x (Linear + tanh), batch on sublanes.
    h1 = jnp.tanh(jnp.dot(x, w1, preferred_element_type=jnp.float32) + b1)
    h2 = jnp.tanh(jnp.dot(h1, w2, preferred_element_type=jnp.float32) + b2)

    # Fused actor+critic head, emitted TRANSPOSED so the batch lands on the
    # 128-lane axis (lane-dense epilogue/stores).  NT matmul:
    #   head_t[k, b] = sum_j w_head_t[k, j] * h2[b, j]
    head_t = jax.lax.dot_general(
        w_head_t, h2, (((1,), (1,)), ((), ())),
        preferred_element_type=jnp.float32) + b_head       # (A+1, TM)

    logits_t = head_t[0:NUM_ACTIONS, :]                    # (A, TM)
    value_row = head_t[NUM_ACTIONS:NUM_HEAD, :]            # (1, TM)

    # Numerically-stable log-softmax pieces over the (small) action axis.
    m = jnp.max(logits_t, axis=0, keepdims=True)           # (1, TM)
    z = logits_t - m
    lse = jnp.log(jnp.sum(jnp.exp(z), axis=0, keepdims=True))

    # Deterministic action = argmax (ties -> lowest index, like torch/np).
    row = jax.lax.broadcasted_iota(jnp.int32, logits_t.shape, 0)
    is_max = logits_t == m
    action_row = jnp.min(jnp.where(is_max, row, NUM_ACTIONS),
                         axis=0, keepdims=True)            # (1, TM)

    value_ref[...] = value_row
    action_ref[...] = action_row.astype(jnp.int32)
    # log_softmax at the argmax: z == 0 there, so it is exactly -lse.
    logp_ref[...] = -lse


def _round_up(x, m):
    return (x + m - 1) // m * m


def pack_params(p):
    """Pack PyTorch-style params into one weight blob and one bias blob."""
    w_head_t = jnp.concatenate([p["wa"].T, p["wv"].T], axis=0)        # (A+1, H)
    w_blob = jnp.concatenate([p["w1"], p["w2"], w_head_t], axis=0)    # (53, H)
    b_blob = jnp.zeros((B_ROWS, HIDDEN), jnp.float32)
    b_blob = b_blob.at[0, :].set(p["b1"])
    b_blob = b_blob.at[1, :].set(p["b2"])
    head_b = jnp.concatenate([p["ba"], p["bv"]])                      # (A+1,)
    b_blob = b_blob.at[2:2 + NUM_HEAD, 0].set(head_b)
    return w_blob.astype(jnp.float32), b_blob


def ff_policy_act(inputs, w_blob, b_blob, *, block_rows=1024):
    """act(inputs, deterministic=True) -> (value, action, action_log_probs)."""
    b = inputs.shape[0]
    tm = max(128, _round_up(min(block_rows, b), 128))   # lane-dense output tile
    padded_b = _round_up(b, tm)
    if padded_b != b:
        inputs = jnp.pad(inputs, ((0, padded_b - b), (0, 0)))
    grid = (padded_b // tm,)

    out_spec = pl.BlockSpec((1, tm), lambda i: (0, i))     # batch on lanes
    out_shape = (
        jax.ShapeDtypeStruct((1, padded_b), jnp.float32),  # value
        jax.ShapeDtypeStruct((1, padded_b), jnp.int32),    # action
        jax.ShapeDtypeStruct((1, padded_b), jnp.float32),  # action_log_probs
    )

    fn = pl.pallas_call(
        _ff_policy_act_kernel,
        out_shape=out_shape,
        grid=grid,
        in_specs=[
            pl.BlockSpec((tm, OBS_DIM), lambda i: (i, 0)),   # x tile, pipelined
            pl.BlockSpec((W_ROWS, HIDDEN), lambda i: (0, 0)),  # weights, once
            pl.BlockSpec((B_ROWS, HIDDEN), lambda i: (0, 0)),  # biases, once
        ],
        out_specs=(out_spec, out_spec, out_spec),
        compiler_params=pltpu.CompilerParams(
            dimension_semantics=("parallel",),        # 2 TCs on v7x
            vmem_limit_bytes=32 * 1024 * 1024,        # explicit headroom (v7x)
        ),
    )
    v, a, lp = fn(inputs, w_blob, b_blob)
    value = v.reshape(-1, 1)[:b]
    action = a.reshape(-1, 1)[:b]
    logp = lp.reshape(-1, 1)[:b]
    return value, action, logp


def init_params(key):
    """Deterministic nn.Linear-style init (uniform +/- 1/sqrt(fan_in))."""
    ks = jax.random.split(key, 8)

    def lin(kw, kb, fan_in, fan_out):
        s = 1.0 / jnp.sqrt(jnp.float32(fan_in))
        w = jax.random.uniform(kw, (fan_in, fan_out), jnp.float32, -s, s)
        b = jax.random.uniform(kb, (fan_out,), jnp.float32, -s, s)
        return w, b

    w1, b1 = lin(ks[0], ks[1], OBS_DIM, HIDDEN)
    w2, b2 = lin(ks[2], ks[3], HIDDEN, HIDDEN)
    wv, bv = lin(ks[4], ks[5], HIDDEN, 1)
    wa, ba = lin(ks[6], ks[7], HIDDEN, NUM_ACTIONS)
    return dict(w1=w1, b1=b1, w2=w2, b2=b2, wv=wv, bv=bv, wa=wa, ba=ba)


if __name__ == "__main__":
    key = jax.random.PRNGKey(0)
    pkey, xkey = jax.random.split(key)
    params = init_params(pkey)
    w_blob, b_blob = pack_params(params)

    # Non-multiple-of-tile batch exercises padding + an 8-step pipelined grid.
    B = 1000
    x = jax.random.normal(xkey, (B, OBS_DIM), jnp.float32)

    value, action, logp = jax.block_until_ready(
        ff_policy_act(x, w_blob, b_blob, block_rows=128))

    # Plain-JAX reference (PyTorch semantics).
    h1 = jnp.tanh(x @ params["w1"] + params["b1"])
    h2 = jnp.tanh(h1 @ params["w2"] + params["b2"])
    v_ref = h2 @ params["wv"] + params["bv"]
    logits = h2 @ params["wa"] + params["ba"]
    logp_all = jax.nn.log_softmax(logits, axis=-1)
    a_ref = jnp.argmax(logits, axis=-1, keepdims=True).astype(jnp.int32)
    alp_ref = jnp.take_along_axis(logp_all, a_ref, axis=-1)

    assert value.shape == (B, 1) and action.shape == (B, 1) and logp.shape == (B, 1)
    assert jnp.allclose(value, v_ref, atol=1e-5, rtol=1e-5)
    assert jnp.array_equal(action, a_ref)
    assert jnp.allclose(logp, alp_ref, atol=1e-5, rtol=1e-5)
    print("KERNEL_OK")
</pallas_src>

<mosaic_0001>
module attributes {stable_mosaic.version = 11 : i64} {
  func.func @_ff_policy_act_kernel(%arg0: i32, %arg1: memref<128x16xf32, #tpu.memory_space<vmem>>, %arg2: memref<53x32xf32, #tpu.memory_space<vmem>>, %arg3: memref<8x32xf32, #tpu.memory_space<vmem>>, %arg4: memref<1x128xf32, #tpu.memory_space<vmem>>, %arg5: memref<1x128xi32, #tpu.memory_space<vmem>>, %arg6: memref<1x128xf32, #tpu.memory_space<vmem>>) attributes {dimension_semantics = [#tpu.dimension_semantics<parallel>], iteration_bounds = array<i64: 8>, scalar_prefetch = 0 : i64, scratch_operands = 0 : i64, tpu.core_type = #tpu.core_type<tc>, window_params = [{transform_indices = @transform_0, window_bounds = array<i64: 128, 16>}, {pipeline_mode = #tpu.pipeline_mode<synchronous>, transform_indices = @transform_1, window_bounds = array<i64: 53, 32>}, {pipeline_mode = #tpu.pipeline_mode<synchronous>, transform_indices = @transform_2, window_bounds = array<i64: 8, 32>}, {transform_indices = @transform_3, window_bounds = array<i64: 1, 128>}, {transform_indices = @transform_4, window_bounds = array<i64: 1, 128>}, {transform_indices = @transform_5, window_bounds = array<i64: 1, 128>}]} {
    %c0 = arith.constant 0 : index
    %c0_0 = arith.constant 0 : index
    %0 = vector.load %arg1[%c0, %c0_0] : memref<128x16xf32, #tpu.memory_space<vmem>>, vector<128x16xf32>
    %c0_1 = arith.constant 0 : index
    %c0_2 = arith.constant 0 : index
    %1 = vector.load %arg2[%c0_1, %c0_2] : memref<53x32xf32, #tpu.memory_space<vmem>>, vector<16x32xf32>
    %c16 = arith.constant 16 : index
    %c0_3 = arith.constant 0 : index
    %2 = vector.load %arg2[%c16, %c0_3] : memref<53x32xf32, #tpu.memory_space<vmem>>, vector<32x32xf32>
    %c48 = arith.constant 48 : index
    %c0_4 = arith.constant 0 : index
    %3 = vector.load %arg2[%c48, %c0_4] : memref<53x32xf32, #tpu.memory_space<vmem>>, vector<5x32xf32>
    %c0_5 = arith.constant 0 : index
    %c0_6 = arith.constant 0 : index
    %4 = vector.load %arg3[%c0_5, %c0_6] : memref<8x32xf32, #tpu.memory_space<vmem>>, vector<1x32xf32>
    %c1 = arith.constant 1 : index
    %c0_7 = arith.constant 0 : index
    %5 = vector.load %arg3[%c1, %c0_7] : memref<8x32xf32, #tpu.memory_space<vmem>>, vector<1x32xf32>
    %c2 = arith.constant 2 : index
    %c0_8 = arith.constant 0 : index
    %6 = vector.load %arg3[%c2, %c0_8] : memref<8x32xf32, #tpu.memory_space<vmem>>, vector<5x1xf32>
    %cst = arith.constant dense<0.000000e+00> : vector<128x32xf32>
    %7 = tpu.matmul %0, %1, %cst {dimension_numbers = #tpu.dot_dimension_numbers<[1], [0], [0], [1], [0, 0, 1, 1], [], []>} : vector<128x16xf32>, vector<16x32xf32>, vector<128x32xf32> -> vector<128x32xf32>
    %8 = vector.broadcast %4 : vector<1x32xf32> to vector<128x32xf32>
    %9 = arith.addf %7, %8 : vector<128x32xf32>
    %10 = math.tanh %9 : vector<128x32xf32>
    %cst_9 = arith.constant dense<0.000000e+00> : vector<128x32xf32>
    %11 = tpu.matmul %10, %2, %cst_9 {dimension_numbers = #tpu.dot_dimension_numbers<[1], [0], [0], [1], [0, 0, 1, 1], [], []>} : vector<128x32xf32>, vector<32x32xf32>, vector<128x32xf32> -> vector<128x32xf32>
    %12 = vector.broadcast %5 : vector<1x32xf32> to vector<128x32xf32>
    %13 = arith.addf %11, %12 : vector<128x32xf32>
    %14 = math.tanh %13 : vector<128x32xf32>
    %cst_10 = arith.constant dense<0.000000e+00> : vector<5x128xf32>
    %15 = tpu.matmul %3, %14, %cst_10 {dimension_numbers = #tpu.dot_dimension_numbers<[1], [1], [0], [0], [0, 0, 1, 0], [], []>} : vector<5x32xf32>, vector<128x32xf32>, vector<5x128xf32> -> vector<5x128xf32>
    %16 = vector.broadcast %6 : vector<5x1xf32> to vector<5x128xf32>
    %17 = arith.addf %15, %16 : vector<5x128xf32>
    %18 = vector.extract_strided_slice %17 {offsets = [0, 0], sizes = [4, 128], strides = [1, 1]} : vector<5x128xf32> to vector<4x128xf32>
    %19 = vector.extract_strided_slice %17 {offsets = [4, 0], sizes = [1, 128], strides = [1, 1]} : vector<5x128xf32> to vector<1x128xf32>
    %cst_11 = arith.constant dense<0xFF800000> : vector<128xf32>
    %20 = vector.multi_reduction <maximumf>, %18, %cst_11 [0] : vector<4x128xf32> to vector<128xf32>
    %21 = vector.shape_cast %20 : vector<128xf32> to vector<1x128xf32>
    %22 = vector.broadcast %21 : vector<1x128xf32> to vector<4x128xf32>
    %23 = arith.subf %18, %22 : vector<4x128xf32>
    %24 = math.exp %23 : vector<4x128xf32>
    %cst_12 = arith.constant dense<0.000000e+00> : vector<128xf32>
    %25 = vector.multi_reduction <add>, %24, %cst_12 [0] : vector<4x128xf32> to vector<128xf32>
    %26 = vector.shape_cast %25 : vector<128xf32> to vector<1x128xf32>
    %27 = math.log %26 : vector<1x128xf32>
    %28 = tpu.iota {dimensions = array<i32: 0>} : vector<4x128xi32>
    %29 = vector.broadcast %21 : vector<1x128xf32> to vector<4x128xf32>
    %30 = arith.cmpf oeq, %18, %29 : vector<4x128xf32>
    %c4_i32 = arith.constant 4 : i32
    %31 = vector.broadcast %c4_i32 : i32 to vector<4x128xi32>
    %32 = arith.select %30, %28, %31 : vector<4x128xi1>, vector<4x128xi32>
    %cst_13 = arith.constant dense<2147483647> : vector<128xi32>
    %33 = vector.multi_reduction <minsi>, %32, %cst_13 [0] : vector<4x128xi32> to vector<128xi32>
    %34 = vector.shape_cast %33 : vector<128xi32> to vector<1x128xi32>
    %c0_14 = arith.constant 0 : index
    %c0_15 = arith.constant 0 : index
    %35 = vector.load %arg4[%c0_14, %c0_15] : memref<1x128xf32, #tpu.memory_space<vmem>>, vector<1x128xf32>
    tpu.vector_store %arg4[%c0_14, %c0_15], %19 {strides = array<i32>} : memref<1x128xf32, #tpu.memory_space<vmem>>, vector<1x128xf32>,
    %c0_16 = arith.constant 0 : index
    %c0_17 = arith.constant 0 : index
    %36 = vector.load %arg5[%c0_16, %c0_17] : memref<1x128xi32, #tpu.memory_space<vmem>>, vector<1x128xi32>
    tpu.vector_store %arg5[%c0_16, %c0_17], %34 {strides = array<i32>} : memref<1x128xi32, #tpu.memory_space<vmem>>, vector<1x128xi32>,
    %cst_18 = arith.constant 0.000000e+00 : f32
    %37 = vector.broadcast %cst_18 : f32 to vector<1x128xf32>
    %38 = arith.subf %37, %27 : vector<1x128xf32>
    %c0_19 = arith.constant 0 : index
    %c0_20 = arith.constant 0 : index
    %39 = vector.load %arg6[%c0_19, %c0_20] : memref<1x128xf32, #tpu.memory_space<vmem>>, vector<1x128xf32>
    tpu.vector_store %arg6[%c0_19, %c0_20], %38 {strides = array<i32>} : memref<1x128xf32, #tpu.memory_space<vmem>>, vector<1x128xf32>,
    return
  }
  func.func @transform_0(%arg0: i32) -> (i32, i32) {
    %c0_i32 = arith.constant 0 : i32
    %c0_i32_0 = arith.constant 0 : i32
    return %arg0, %c0_i32 : i32, i32
  }
  func.func @transform_1(%arg0: i32) -> (i32, i32) {
    %c0_i32 = arith.constant 0 : i32
    %c0_i32_0 = arith.constant 0 : i32
    %c0_i32_1 = arith.constant 0 : i32
    return %c0_i32, %c0_i32_0 : i32, i32
  }
  func.func @transform_2(%arg0: i32) -> (i32, i32) {
    %c0_i32 = arith.constant 0 : i32
    %c0_i32_0 = arith.constant 0 : i32
    %c0_i32_1 = arith.constant 0 : i32
    return %c0_i32, %c0_i32_0 : i32, i32
  }
  func.func @transform_3(%arg0: i32) -> (i32, i32) {
    %c0_i32 = arith.constant 0 : i32
    %c0_i32_0 = arith.constant 0 : i32
    return %c0_i32, %arg0 : i32, i32
  }
  func.func @transform_4(%arg0: i32) -> (i32, i32) {
    %c0_i32 = arith.constant 0 : i32
    %c0_i32_0 = arith.constant 0 : i32
    return %c0_i32, %arg0 : i32, i32
  }
  func.func @transform_5(%arg0: i32) -> (i32, i32) {
    %c0_i32 = arith.constant 0 : i32
    %c0_i32_0 = arith.constant 0 : i32
    return %c0_i32, %arg0 : i32, i32
  }
}

</mosaic_0001>

<llo_original>
// kernel: tpu_custom_call.1
$region0: #{tpu_custom_call.1}
  #allocation0 [shape = 'u32[]', space=smem, size = 0x4, offset = 0x4, fixed_abs, tag = 'smem constant byte address 0x4 - core index']
  #allocation1 [shape = 'u32[144,128]{1,0:T(1,128)}', space=vmem, size = 0x12000, scoped, tag = 'internal scratch']
  %s0 = inlined_call_operand.vmem [shape: f32[1024,16], index: 0, kind: input, shape index: {}]
  %s1 = inlined_call_operand.vmem [shape: f32[53,32], index: 1, kind: input, shape index: {}]
  %s2 = inlined_call_operand.vmem [shape: f32[8,32], index: 2, kind: input, shape index: {}]
  %s3 = inlined_call_operand.hbm [shape: f32[1,1024], index: 3, kind: output, shape index: {0}]
  %s4 = inlined_call_operand.hbm [shape: s32[1,1024], index: 4, kind: output, shape index: {1}]
  %s5 = inlined_call_operand.hbm [shape: f32[1,1024], index: 5, kind: output, shape index: {2}]
  %6 = xla_tuple %s3, %s4, %s5
  %s7 = sld [smem:[#allocation0]]
  $region61: #{tpu_custom_call.1} parent=0
    _
  %s9 = ssub.s32 1, %s7
  %s10 = scalar_select 0, %s9, %s7
  $region1: #{tpu_custom_call.1} parent=0
    #allocation2 [shape = 'u8[1024]{0}', space=vmem, size = 0x400, scoped, tag = 'output window, operand 0']
    #allocation3 [shape = 's32[2]{0}', space=sflag, size = 0x8, scoped, tag = 'scoped memory for tpu_custom_call.1']
    #allocation4 [shape = 'u8[1024]{0}', space=vmem, size = 0x400, scoped, tag = 'output window, operand 1']
    #allocation5 [shape = 's32[2]{0}', space=sflag, size = 0x8, scoped, tag = 'scoped memory for tpu_custom_call.1']
    #allocation6 [shape = 'u8[1024]{0}', space=vmem, size = 0x400, scoped, tag = 'output window, operand 2']
    %11 = vsyncpa [#allocation3], 0
    %s12 = scalar_lea.sflag [#allocation3], 1
    %13 = vsyncpa %s12, 0
    %14 = vsyncpa [#allocation5], 0
    %s15 = scalar_lea.sflag [#allocation5], 1
    %16 = vsyncpa %s15, 0
    loop: start=0, step=1, limit=10
    $region2: #{tpu_custom_call.1} parent=1 // loop_pre_header
      _
    $region3: #{tpu_custom_call.1} parent=1 // loop_header
      %s18 = sphi 0, %s22
      %p19 = scmp.ge.s32.totalorder %s18, 10
      %s28 = sphi 0, %s30
      %s31 = sphi 0, %s28
      %s32 = sphi 0, %s31
      %s48 = sphi 0, %s32
      %s52 = sphi 0, %s52
      %s54 = sphi 0, %s52
      %s55 = sphi 0, %s54
      %s69 = sphi 0, %s55
      %s73 = sphi 0, %s73
      %s75 = sphi 0, %s73
      %s76 = sphi 0, %s75
      %s90 = sphi 0, %s76
      %s96 = sphi 0, %s98
      %s99 = sphi 0, %s96
      %s100 = sphi 0, %s99
      %s116 = sphi 0, %s100
      %s122 = sphi 0, %s124
      %s125 = sphi 0, %s122
      %s126 = sphi 0, %s125
      %s142 = sphi 0, %s126
      %s148 = sphi 0, %s150
      %s151 = sphi 0, %s148
      %s152 = sphi 0, %s151
      %s168 = sphi 0, %s152
    $region4: #{tpu_custom_call.1} parent=1 // loop_header_branch
      %21 = sbr.rel (%p19) target = $region8
    $region5: #{tpu_custom_call.1} parent=1 // loop_body
      %s23 = ssub.s32 %s18, 1
      %s24 = ssub.s32 %s18, 2
      %s25 = sadd.s32 %s18, 1
      %s26 = ssub.s32 %s18, %s25
      %p27 = scmp.eq.s32.totalorder %s26, 0
      %s29 = sadd.s32 %s28, 1
      %s30 = scalar_select %p27, %s28, %s29
      %p33 = pneg %p27
      %p34 = scmp.eq.s32.totalorder %s18, 7
      %p35 = por %p33, %p34
      %p36 = scmp.ne.s32.totalorder %s28, %s31
      %p37 = scmp.eq.s32.totalorder %s18, 0
      %p38 = por %p36, %p37
      %p39 = scmp.ne.s32.totalorder %s28, %s31
      %p40 = scmp.eq.s32.totalorder %s23, 7
      %p41 = por %p39, %p40
      %p42 = scmp.ne.s32.totalorder %s31, %s32
      %p43 = scmp.eq.s32.totalorder %s23, 0
      %p44 = por %p42, %p43
      %p45 = scmp.ne.s32.totalorder %s31, %s32
      %p46 = scmp.eq.s32.totalorder %s24, 7
      %p47 = por %p45, %p46
      %p49 = scmp.ne.s32.totalorder %s32, %s48
      %p50 = scmp.eq.s32.totalorder %s24, 0
      %p51 = por %p49, %p50
      %s53 = sadd.s32 %s52, 1
      %p56 = scmp.eq.s32.totalorder %s18, 7
      %p57 = scmp.ne.s32.totalorder %s52, %s54
      %p58 = scmp.eq.s32.totalorder %s18, 0
      %p59 = por %p57, %p58
      %p60 = scmp.ne.s32.totalorder %s52, %s54
      %p61 = scmp.eq.s32.totalorder %s23, 7
      %p62 = por %p60, %p61
      %p63 = scmp.ne.s32.totalorder %s54, %s55
      %p64 = scmp.eq.s32.totalorder %s23, 0
      %p65 = por %p63, %p64
      %p66 = scmp.ne.s32.totalorder %s54, %s55
      %p67 = scmp.eq.s32.totalorder %s24, 7
      %p68 = por %p66, %p67
      %p70 = scmp.ne.s32.totalorder %s55, %s69
      %p71 = scmp.eq.s32.totalorder %s24, 0
      %p72 = por %p70, %p71
      %s74 = sadd.s32 %s73, 1
      %p77 = scmp.eq.s32.totalorder %s18, 7
      %p78 = scmp.ne.s32.totalorder %s73, %s75
      %p79 = scmp.eq.s32.totalorder %s18, 0
      %p80 = por %p78, %p79
      %p81 = scmp.ne.s32.totalorder %s73, %s75
      %p82 = scmp.eq.s32.totalorder %s23, 7
      %p83 = por %p81, %p82
      %p84 = scmp.ne.s32.totalorder %s75, %s76
      %p85 = scmp.eq.s32.totalorder %s23, 0
      %p86 = por %p84, %p85
      %p87 = scmp.ne.s32.totalorder %s75, %s76
      %p88 = scmp.eq.s32.totalorder %s24, 7
      %p89 = por %p87, %p88
      %p91 = scmp.ne.s32.totalorder %s76, %s90
      %p92 = scmp.eq.s32.totalorder %s24, 0
      %p93 = por %p91, %p92
      %s94 = ssub.s32 %s18, %s25
      %p95 = scmp.eq.s32.totalorder %s94, 0
      %s97 = sadd.s32 %s96, 1
      %s98 = scalar_select %p95, %s96, %s97
      %p101 = pneg %p95
      %p102 = scmp.eq.s32.totalorder %s18, 7
      %p103 = por %p101, %p102
      %p104 = scmp.ne.s32.totalorder %s96, %s99
      %p105 = scmp.eq.s32.totalorder %s18, 0
      %p106 = por %p104, %p105
      %p107 = scmp.ne.s32.totalorder %s96, %s99
      %p108 = scmp.eq.s32.totalorder %s23, 7
      %p109 = por %p107, %p108
      %p110 = scmp.ne.s32.totalorder %s99, %s100
      %p111 = scmp.eq.s32.totalorder %s23, 0
      %p112 = por %p110, %p111
      %p113 = scmp.ne.s32.totalorder %s99, %s100
      %p114 = scmp.eq.s32.totalorder %s24, 7
      %p115 = por %p113, %p114
      %p117 = scmp.ne.s32.totalorder %s100, %s116
      %p118 = scmp.eq.s32.totalorder %s24, 0
      %p119 = por %p117, %p118
      %s120 = ssub.s32 %s18, %s25
      %p121 = scmp.eq.s32.totalorder %s120, 0
      %s123 = sadd.s32 %s122, 1
      %s124 = scalar_select %p121, %s122, %s123
      %p127 = pneg %p121
      %p128 = scmp.eq.s32.totalorder %s18, 7
      %p129 = por %p127, %p128
      %p130 = scmp.ne.s32.totalorder %s122, %s125
      %p131 = scmp.eq.s32.totalorder %s18, 0
      %p132 = por %p130, %p131
      %p133 = scmp.ne.s32.totalorder %s122, %s125
      %p134 = scmp.eq.s32.totalorder %s23, 7
      %p135 = por %p133, %p134
      %p136 = scmp.ne.s32.totalorder %s125, %s126
      %p137 = scmp.eq.s32.totalorder %s23, 0
      %p138 = por %p136, %p137
      %p139 = scmp.ne.s32.totalorder %s125, %s126
      %p140 = scmp.eq.s32.totalorder %s24, 7
      %p141 = por %p139, %p140
      %p143 = scmp.ne.s32.totalorder %s126, %s142
      %p144 = scmp.eq.s32.totalorder %s24, 0
      %p145 = por %p143, %p144
      %s146 = ssub.s32 %s18, %s25
      %p147 = scmp.eq.s32.totalorder %s146, 0
      %s149 = sadd.s32 %s148, 1
      %s150 = scalar_select %p147, %s148, %s149
      %p153 = pneg %p147
      %p154 = scmp.eq.s32.totalorder %s18, 7
      %p155 = por %p153, %p154
      %p156 = scmp.ne.s32.totalorder %s148, %s151
      %p157 = scmp.eq.s32.totalorder %s18, 0
      %p158 = por %p156, %p157
      %p159 = scmp.ne.s32.totalorder %s148, %s151
      %p160 = scmp.eq.s32.totalorder %s23, 7
      %p161 = por %p159, %p160
      %p162 = scmp.ne.s32.totalorder %s151, %s152
      %p163 = scmp.eq.s32.totalorder %s23, 0
      %p164 = por %p162, %p163
      %p165 = scmp.ne.s32.totalorder %s151, %s152
      %p166 = scmp.eq.s32.totalorder %s24, 7
      %p167 = por %p165, %p166
      %p169 = scmp.ne.s32.totalorder %s152, %s168
      %p170 = scmp.eq.s32.totalorder %s24, 0
      %p171 = por %p169, %p170
      %p172 = scmp.le.s32.totalorder 1, %s18
      %p173 = scmp.lt.s32.totalorder %s18, 9
      %p174 = pnand %p172, %p173
      %p175 = pneg %p174
      // Predicated region
      $region9: #{tpu_custom_call.1} parent=5 // pred_check
        _
      $region10: #{tpu_custom_call.1} parent=5 // pred_check_branch
        %177 = sbr.rel (%p174) target = $region12
      $region11: #{tpu_custom_call.1} parent=5 // pred_region
        %s178 = ssub.s32 %s18, 1
        // Predicated region
        $region13: #{tpu_custom_call.1} parent=11 // pred_check
          %p179 = pneg %p65
        $region14: #{tpu_custom_call.1} parent=11 // pred_check_branch
          %181 = sbr.rel (%p179) target = $region16
        $region15: #{tpu_custom_call.1} parent=11 // pred_region
          _
        $region16: #{tpu_custom_call.1} parent=11 // pred_fallthru
          _
        // Predicated region
        $region17: #{tpu_custom_call.1} parent=11 // pred_check
          %p182 = pneg %p86
        $region18: #{tpu_custom_call.1} parent=11 // pred_check_branch
          %184 = sbr.rel (%p182) target = $region20
        $region19: #{tpu_custom_call.1} parent=11 // pred_region
          _
        $region20: #{tpu_custom_call.1} parent=11 // pred_fallthru
          _
      $region12: #{tpu_custom_call.1} parent=5 // pred_fallthru
        _
      %p185 = scmp.lt.s32.totalorder %s18, 8
      // Predicated region
      $region21: #{tpu_custom_call.1} parent=5 // pred_check
        %p186 = pneg %p185
      $region22: #{tpu_custom_call.1} parent=5 // pred_check_branch
        %188 = sbr.rel (%p186) target = $region24
      $region23: #{tpu_custom_call.1} parent=5 // pred_region
        // Predicated region
        $region25: #{tpu_custom_call.1} parent=23 // pred_check
          %p189 = pneg %p38
        $region26: #{tpu_custom_call.1} parent=23 // pred_check_branch
          %191 = sbr.rel (%p189) target = $region28
        $region27: #{tpu_custom_call.1} parent=23 // pred_region
          %s192 = smul.u32 16, %s18
          %p193 = scmp.lt.s32.totalorder %s192, 127
          %s194 = scalar_select %p193, %s192, 127
          %s195 = smul.addr %s194, 8
          %s196 = scalar_lea.vmem %s0, %s195
          %s197 = smul.u32 16, %s18
        $region28: #{tpu_custom_call.1} parent=23 // pred_fallthru
          _
      $region24: #{tpu_custom_call.1} parent=5 // pred_fallthru
        _
      %p198 = scmp.le.s32.totalorder 1, %s18
      %p199 = scmp.lt.s32.totalorder %s18, 9
      %p200 = pnand %p198, %p199
      %p201 = pneg %p200
      // Predicated region
      $region29: #{tpu_custom_call.1} parent=5 // pred_check
        _
      $region30: #{tpu_custom_call.1} parent=5 // pred_check_branch
        %203 = sbr.rel (%p200) target = $region32
      $region31: #{tpu_custom_call.1} parent=5 // pred_region
        %s204 = ssub.s32 %s18, 1
        %s205 = smul.u32 16, %s23
        %p206 = scmp.lt.s32.totalorder %s205, 127
        %s207 = scalar_select %p206, %s205, 127
        %s208 = smul.addr %s207, 8
        %s209 = scalar_lea.vmem %s0, %s208
        %p210 = pneg %p44
        %p211 = pneg %p41
        %p212 = pneg %p65
        %p213 = pneg %p62
        %p214 = pneg %p86
        %p215 = pneg %p83
        %p216 = pneg %p112
        %p217 = pneg %p109
        %s218 = sand.u32 %s99, 1
        %s219 = scalar_lea.sflag [#allocation3], %s218
        %s220 = sand.u32 %s99, 1
        %s221 = scalar_lea.vmem [#allocation2], %s220
        %p222 = pneg %p138
        %p223 = pneg %p135
        %s224 = sand.u32 %s23, 1
        %s225 = scalar_lea.sflag [#allocation5], %s224
        %s226 = sand.u32 %s125, 1
        %s227 = scalar_lea.vmem [#allocation4], %s226
        %p228 = pneg %p164
        %p229 = pneg %p161
        %s230 = sand.u32 %s23, 1
        %s231 = scalar_lea.sflag [#allocation5], %s230
        %s232 = sand.u32 %s151, 1
        %s233 = scalar_lea.vmem [#allocation6], %s232
        %s234 = smul.u32 16, %s23
        %p235 = scmp.lt.s32.totalorder %s234, 127
        %s236 = scalar_select %p235, %s234, 127
        %s237 = smul.addr %s236, 8
        %s238 = scalar_lea.vmem %s0, %s237
        %s239 = smul.u32 16, %s23
        %v240 = vld [vmem:[%s238] sm:$0xff]
        %v241 = vld [vmem:[%s238 + $0x8] sm:$0xff]
        %v242 = vld [vmem:[%s238 + $0x10] sm:$0xff]
        %v243 = vld [vmem:[%s238 + $0x18] sm:$0xff]
        %v244 = vld [vmem:[%s238 + $0x20] sm:$0xff]
        %v245 = vld [vmem:[%s238 + $0x28] sm:$0xff]
        %v246 = vld [vmem:[%s238 + $0x30] sm:$0xff]
        %v247 = vld [vmem:[%s238 + $0x38] sm:$0xff]
        %v248 = vld [vmem:[%s238 + $0x40] sm:$0xff]
        %v249 = vld [vmem:[%s238 + $0x48] sm:$0xff]
        %v250 = vld [vmem:[%s238 + $0x50] sm:$0xff]
        %v251 = vld [vmem:[%s238 + $0x58] sm:$0xff]
        %v252 = vld [vmem:[%s238 + $0x60] sm:$0xff]
        %v253 = vld [vmem:[%s238 + $0x68] sm:$0xff]
        %v254 = vld [vmem:[%s238 + $0x70] sm:$0xff]
        %v255 = vld [vmem:[%s238 + $0x78] sm:$0xff]
        %v256 = vld [vmem:[%s1] sm:$0xff]
        %v257 = vld [vmem:[%s1 + $0x8] sm:$0xff]
        %v258 = vld [vmem:[%s1 + $0x10] sm:$0xff]
        %v259 = vld [vmem:[%s1 + $0x18] sm:$0xff]
        %v260 = vld [vmem:[%s1 + $0x20] sm:$0xff]
        %v261 = vld [vmem:[%s1 + $0x28] sm:$0xff]
        %v262 = vld [vmem:[%s1 + $0x30] sm:$0x1f]
        %v263 = vld [vmem:[%s2] sm:$0x1]
        %v264 = vld [vmem:[%s2 + $0x1] sm:$0x1]
        %v265 = vld [vmem:[%s2 + $0x2] sm:$0x1f]
        %v266 = vlaneseq
        %v267 = vshrl.u32 %v266, 7
        %v268 = vsub.s32 0, %v267
        %v269 = vrot.slane %v263, %v268
        %vm270 = vcmask 130048
        %v272 = vsel %vm270, %v240, 0
        %v275 = vsel %vm270, %v241, 0
        %v278 = vsel %vm270, %v242, 0
        %v281 = vsel %vm270, %v243, 0
        %v284 = vsel %vm270, %v244, 0
        %v287 = vsel %vm270, %v245, 0
        %v290 = vsel %vm270, %v246, 0
        %v293 = vsel %vm270, %v247, 0
        %v296 = vsel %vm270, %v248, 0
        %v299 = vsel %vm270, %v249, 0
        %v302 = vsel %vm270, %v250, 0
        %v305 = vsel %vm270, %v251, 0
        %v308 = vsel %vm270, %v252, 0
        %v311 = vsel %vm270, %v253, 0
        %v314 = vsel %vm270, %v254, 0
        %v317 = vsel %vm270, %v255, 0
        %319 = vmatprep.subr.mxu0 0.0
        %320 = vmatpush1.msra.mxu0 %v256
        %321 = vmatprep.subr.mxu0 0.0
        %322 = vmatpush1.msra.mxu0 %v257
        %323 = vmatprep.subr.mxu0 0.0
        %324 = vmatpush1.msra.mxu0 0.0
        %325 = vmatprep.subr.mxu0 0.0
        %326 = vmatpush1.msra.mxu0 0.0
        %327 = vmatprep.subr.mxu0 0.0
        %328 = vmatpush1.msra.mxu0 0.0
        %329 = vmatprep.subr.mxu0 0.0
        %330 = vmatpush1.msra.mxu0 0.0
        %331 = vmatprep.subr.mxu0 0.0
        %332 = vmatpush1.msra.mxu0 0.0
        %333 = vmatprep.subr.mxu0 0.0
        %334 = vmatpush1.msra.mxu0 0.0
        %335 = vmatprep.subr.mxu0 0.0
        %336 = vmatpush1.msra.mxu0 0.0
        %337 = vmatprep.subr.mxu0 0.0
        %338 = vmatpush1.msra.mxu0 0.0
        %339 = vmatprep.subr.mxu0 0.0
        %340 = vmatpush1.msra.mxu0 0.0
        %341 = vmatprep.subr.mxu0 0.0
        %342 = vmatpush1.msra.mxu0 0.0
        %343 = vmatprep.subr.mxu0 0.0
        %344 = vmatpush1.msra.mxu0 0.0
        %345 = vmatprep.subr.mxu0 0.0
        %346 = vmatpush1.msra.mxu0 0.0
        %347 = vmatprep.subr.mxu0 0.0
        %348 = vmatpush1.msra.mxu0 0.0
        %349 = vmatprep.subr.mxu0 0.0
        %350 = vmatpush1.msra.mxu0 0.0
        %351 = vmatprep.subr.mxu0 0.0
        %352 = vmatpush1.msra.mxu0 0.0
        %353 = vmatprep.subr.mxu0 0.0
        %354 = vmatpush1.msra.mxu0 0.0
        %355 = vmatprep.subr.mxu0 0.0
        %356 = vmatpush1.msra.mxu0 0.0
        %357 = vmatprep.subr.mxu0 0.0
        %358 = vmatpush1.msra.mxu0 0.0
        %359 = vmatprep.subr.mxu0 0.0
        %360 = vmatpush1.msra.mxu0 0.0
        %361 = vmatprep.subr.mxu0 0.0
        %362 = vmatpush1.msra.mxu0 0.0
        %363 = vmatprep.subr.mxu0 0.0
        %364 = vmatpush1.msra.mxu0 0.0
        %365 = vmatprep.subr.mxu0 0.0
        %366 = vmatpush1.msra.mxu0 0.0
        %367 = vmatprep.subr.mxu0 0.0
        %368 = vmatpush1.msra.mxu0 0.0
        %369 = vmatprep.subr.mxu0 0.0
        %370 = vmatpush1.msra.mxu0 0.0
        %371 = vmatprep.subr.mxu0 0.0
        %372 = vmatpush1.msra.mxu0 0.0
        %373 = vmatprep.subr.mxu0 0.0
        %374 = vmatpush1.msra.mxu0 0.0
        %375 = vmatprep.subr.mxu0 0.0
        %376 = vmatpush1.msra.mxu0 0.0
        %377 = vmatprep.subr.mxu0 0.0
        %378 = vmatpush1.msra.mxu0 0.0
        %379 = vmatprep.subr.mxu0 0.0
        %380 = vmatpush1.msra.mxu0 0.0
        %381 = vmatprep.subr.mxu0 0.0
        %382 = vmatpush1.msra.mxu0 0.0
        %383 = vmatprep.mubr.f32.mxu0 0.0
        %384 = vmatmul.mubr.f32.gmra.mrb[0].mxu0 %v272
        %v385 = vpop.f32.mrb[0].mxu0
        %v386 = vadd.f32 %v269, %v385
        %v387 = vpop.f32.mrb[0].mxu0
        %388 = vmatprep.mubr.f32.mxu0 0.0
        %389 = vmatmul.mubr.f32.gmra.mrb[0].mxu0 %v275
        %v390 = vpop.f32.mrb[0].mxu0
        %v391 = vadd.f32 %v269, %v390
        %v392 = vpop.f32.mrb[0].mxu0
        %393 = vmatprep.mubr.f32.mxu0 0.0
        %394 = vmatmul.mubr.f32.gmra.mrb[0].mxu0 %v278
        %v395 = vpop.f32.mrb[0].mxu0
        %v396 = vadd.f32 %v269, %v395
        %v397 = vpop.f32.mrb[0].mxu0
        %398 = vmatprep.mubr.f32.mxu0 0.0
        %399 = vmatmul.mubr.f32.gmra.mrb[0].mxu0 %v281
        %v400 = vpop.f32.mrb[0].mxu0
        %v401 = vadd.f32 %v269, %v400
        %v402 = vpop.f32.mrb[0].mxu0
        %403 = vmatprep.mubr.f32.mxu0 0.0
        %404 = vmatmul.mubr.f32.gmra.mrb[0].mxu0 %v284
        %v405 = vpop.f32.mrb[0].mxu0
        %v406 = vadd.f32 %v269, %v405
        %v407 = vpop.f32.mrb[0].mxu0
        %408 = vmatprep.mubr.f32.mxu0 0.0
        %409 = vmatmul.mubr.f32.gmra.mrb[0].mxu0 %v287
        %v410 = vpop.f32.mrb[0].mxu0
        %v411 = vadd.f32 %v269, %v410
        %v412 = vpop.f32.mrb[0].mxu0
        %413 = vmatprep.mubr.f32.mxu0 0.0
        %414 = vmatmul.mubr.f32.gmra.mrb[0].mxu0 %v290
        %v415 = vpop.f32.mrb[0].mxu0
        %v416 = vadd.f32 %v269, %v415
        %v417 = vpop.f32.mrb[0].mxu0
        %418 = vmatprep.mubr.f32.mxu0 0.0
        %419 = vmatmul.mubr.f32.gmra.mrb[0].mxu0 %v293
        %v420 = vpop.f32.mrb[0].mxu0
        %v421 = vadd.f32 %v269, %v420
        %v422 = vpop.f32.mrb[0].mxu0
        %423 = vmatprep.mubr.f32.mxu0 0.0
        %424 = vmatmul.mubr.f32.gmra.mrb[0].mxu0 %v296
        %v425 = vpop.f32.mrb[0].mxu0
        %v426 = vadd.f32 %v269, %v425
        %v427 = vpop.f32.mrb[0].mxu0
        %428 = vmatprep.mubr.f32.mxu0 0.0
        %429 = vmatmul.mubr.f32.gmra.mrb[0].mxu0 %v299
        %v430 = vpop.f32.mrb[0].mxu0
        %v431 = vadd.f32 %v269, %v430
        %v432 = vpop.f32.mrb[0].mxu0
        %433 = vmatprep.mubr.f32.mxu0 0.0
        %434 = vmatmul.mubr.f32.gmra.mrb[0].mxu0 %v302
        %v435 = vpop.f32.mrb[0].mxu0
        %v436 = vadd.f32 %v269, %v435
        %v437 = vpop.f32.mrb[0].mxu0
        %438 = vmatprep.mubr.f32.mxu0 0.0
        %439 = vmatmul.mubr.f32.gmra.mrb[0].mxu0 %v305
        %v440 = vpop.f32.mrb[0].mxu0
        %v441 = vadd.f32 %v269, %v440
        %v442 = vpop.f32.mrb[0].mxu0
        %443 = vmatprep.mubr.f32.mxu0 0.0
        %444 = vmatmul.mubr.f32.gmra.mrb[0].mxu0 %v308
        %v445 = vpop.f32.mrb[0].mxu0
        %v446 = vadd.f32 %v269, %v445
        %v447 = vpop.f32.mrb[0].mxu0
        %448 = vmatprep.mubr.f32.mxu0 0.0
        %449 = vmatmul.mubr.f32.gmra.mrb[0].mxu0 %v311
        %v450 = vpop.f32.mrb[0].mxu0
        %v451 = vadd.f32 %v269, %v450
        %v452 = vpop.f32.mrb[0].mxu0
        %453 = vmatprep.mubr.f32.mxu0 0.0
        %454 = vmatmul.mubr.f32.gmra.mrb[0].mxu0 %v314
        %v455 = vpop.f32.mrb[0].mxu0
        %v456 = vadd.f32 %v269, %v455
        %v457 = vpop.f32.mrb[0].mxu0
        %458 = vmatprep.mubr.f32.mxu0 0.0
        %459 = vmatmul.mubr.f32.gmra.mrb[0].mxu0 %v317
        %v460 = vpop.f32.mrb[0].mxu0
        %v461 = vadd.f32 %v269, %v460
        %v462 = vpop.f32.mrb[0].mxu0
        %463 = vdwg.mxu0
        %v464 = vtanh.pop %v386
        %v465 = vtanh.pop %v391
        %v466 = vtanh.pop %v396
        %v467 = vtanh.pop %v401
        %v468 = vtanh.pop %v406
        %v469 = vtanh.pop %v411
        %v470 = vtanh.pop %v416
        %v471 = vtanh.pop %v421
        %v472 = vtanh.pop %v426
        %v473 = vtanh.pop %v431
        %v474 = vtanh.pop %v436
        %v475 = vtanh.pop %v441
        %v476 = vtanh.pop %v446
        %v477 = vtanh.pop %v451
        %v478 = vtanh.pop %v456
        %v479 = vtanh.pop %v461
        %v480 = vlaneseq
        %v481 = vshrl.u32 %v480, 7
        %v482 = vsub.s32 0, %v481
        %v483 = vrot.slane %v264, %v482
        %vm484 = vcmask 261120
        %v486 = vsel %vm484, %v464, 0
        %v489 = vsel %vm484, %v465, 0
        %v492 = vsel %vm484, %v466, 0
        %v495 = vsel %vm484, %v467, 0
        %v498 = vsel %vm484, %v468, 0
        %v501 = vsel %vm484, %v469, 0
        %v504 = vsel %vm484, %v470, 0
        %v507 = vsel %vm484, %v471, 0
        %v510 = vsel %vm484, %v472, 0
        %v513 = vsel %vm484, %v473, 0
        %v516 = vsel %vm484, %v474, 0
        %v519 = vsel %vm484, %v475, 0
        %v522 = vsel %vm484, %v476, 0
        %v525 = vsel %vm484, %v477, 0
        %v528 = vsel %vm484, %v478, 0
        %v531 = vsel %vm484, %v479, 0
        %533 = vmatprep.subr.mxu0 0.0
        %534 = vmatpush1.msra.mxu0 %v258
        %535 = vmatprep.subr.mxu0 0.0
        %536 = vmatpush1.msra.mxu0 %v259
        %537 = vmatprep.subr.mxu0 0.0
        %538 = vmatpush1.msra.mxu0 %v260
        %539 = vmatprep.subr.mxu0 0.0
        %540 = vmatpush1.msra.mxu0 %v261
        %541 = vmatprep.subr.mxu0 0.0
        %542 = vmatpush1.msra.mxu0 0.0
        %543 = vmatprep.subr.mxu0 0.0
        %544 = vmatpush1.msra.mxu0 0.0
        %545 = vmatprep.subr.mxu0 0.0
        %546 = vmatpush1.msra.mxu0 0.0
        %547 = vmatprep.subr.mxu0 0.0
        %548 = vmatpush1.msra.mxu0 0.0
        %549 = vmatprep.subr.mxu0 0.0
        %550 = vmatpush1.msra.mxu0 0.0
        %551 = vmatprep.subr.mxu0 0.0
        %552 = vmatpush1.msra.mxu0 0.0
        %553 = vmatprep.subr.mxu0 0.0
        %554 = vmatpush1.msra.mxu0 0.0
        %555 = vmatprep.subr.mxu0 0.0
        %556 = vmatpush1.msra.mxu0 0.0
        %557 = vmatprep.subr.mxu0 0.0
        %558 = vmatpush1.msra.mxu0 0.0
        %559 = vmatprep.subr.mxu0 0.0
        %560 = vmatpush1.msra.mxu0 0.0
        %561 = vmatprep.subr.mxu0 0.0
        %562 = vmatpush1.msra.mxu0 0.0
        %563 = vmatprep.subr.mxu0 0.0
        %564 = vmatpush1.msra.mxu0 0.0
        %565 = vmatprep.subr.mxu0 0.0
        %566 = vmatpush1.msra.mxu0 0.0
        %567 = vmatprep.subr.mxu0 0.0
        %568 = vmatpush1.msra.mxu0 0.0
        %569 = vmatprep.subr.mxu0 0.0
        %570 = vmatpush1.msra.mxu0 0.0
        %571 = vmatprep.subr.mxu0 0.0
        %572 = vmatpush1.msra.mxu0 0.0
        %573 = vmatprep.subr.mxu0 0.0
        %574 = vmatpush1.msra.mxu0 0.0
        %575 = vmatprep.subr.mxu0 0.0
        %576 = vmatpush1.msra.mxu0 0.0
        %577 = vmatprep.subr.mxu0 0.0
        %578 = vmatpush1.msra.mxu0 0.0
        %579 = vmatprep.subr.mxu0 0.0
        %580 = vmatpush1.msra.mxu0 0.0
        %581 = vmatprep.subr.mxu0 0.0
        %582 = vmatpush1.msra.mxu0 0.0
        %583 = vmatprep.subr.mxu0 0.0
        %584 = vmatpush1.msra.mxu0 0.0
        %585 = vmatprep.subr.mxu0 0.0
        %586 = vmatpush1.msra.mxu0 0.0
        %587 = vmatprep.subr.mxu0 0.0
        %588 = vmatpush1.msra.mxu0 0.0
        %589 = vmatprep.subr.mxu0 0.0
        %590 = vmatpush1.msra.mxu0 0.0
        %591 = vmatprep.subr.mxu0 0.0
        %592 = vmatpush1.msra.mxu0 0.0
        %593 = vmatprep.subr.mxu0 0.0
        %594 = vmatpush1.msra.mxu0 0.0
        %595 = vmatprep.subr.mxu0 0.0
        %596 = vmatpush1.msra.mxu0 0.0
        %597 = vmatprep.mubr.f32.mxu0 0.0
        %598 = vmatmul.mubr.f32.gmra.mrb[0].mxu0 %v486
        %v599 = vpop.f32.mrb[0].mxu0
        %v600 = vadd.f32 %v483, %v599
        %v601 = vpop.f32.mrb[0].mxu0
        %602 = vmatprep.mubr.f32.mxu0 0.0
        %603 = vmatmul.mubr.f32.gmra.mrb[0].mxu0 %v489
        %v604 = vpop.f32.mrb[0].mxu0
        %v605 = vadd.f32 %v483, %v604
        %v606 = vpop.f32.mrb[0].mxu0
        %607 = vmatprep.mubr.f32.mxu0 0.0
        %608 = vmatmul.mubr.f32.gmra.mrb[0].mxu0 %v492
        %v609 = vpop.f32.mrb[0].mxu0
        %v610 = vadd.f32 %v483, %v609
        %v611 = vpop.f32.mrb[0].mxu0
        %612 = vmatprep.mubr.f32.mxu0 0.0
        %613 = vmatmul.mubr.f32.gmra.mrb[0].mxu0 %v495
        %v614 = vpop.f32.mrb[0].mxu0
        %v615 = vadd.f32 %v483, %v614
        %v616 = vpop.f32.mrb[0].mxu0
        %617 = vmatprep.mubr.f32.mxu0 0.0
        %618 = vmatmul.mubr.f32.gmra.mrb[0].mxu0 %v498
        %v619 = vpop.f32.mrb[0].mxu0
        %v620 = vadd.f32 %v483, %v619
        %v621 = vpop.f32.mrb[0].mxu0
        %622 = vmatprep.mubr.f32.mxu0 0.0
        %623 = vmatmul.mubr.f32.gmra.mrb[0].mxu0 %v501
        %v624 = vpop.f32.mrb[0].mxu0
        %v625 = vadd.f32 %v483, %v624
        %v626 = vpop.f32.mrb[0].mxu0
        %627 = vmatprep.mubr.f32.mxu0 0.0
        %628 = vmatmul.mubr.f32.gmra.mrb[0].mxu0 %v504
        %v629 = vpop.f32.mrb[0].mxu0
        %v630 = vadd.f32 %v483, %v629
        %v631 = vpop.f32.mrb[0].mxu0
        %632 = vmatprep.mubr.f32.mxu0 0.0
        %633 = vmatmul.mubr.f32.gmra.mrb[0].mxu0 %v507
        %v634 = vpop.f32.mrb[0].mxu0
        %v635 = vadd.f32 %v483, %v634
        %v636 = vpop.f32.mrb[0].mxu0
        %637 = vmatprep.mubr.f32.mxu0 0.0
        %638 = vmatmul.mubr.f32.gmra.mrb[0].mxu0 %v510
        %v639 = vpop.f32.mrb[0].mxu0
        %v640 = vadd.f32 %v483, %v639
        %v641 = vpop.f32.mrb[0].mxu0
        %642 = vmatprep.mubr.f32.mxu0 0.0
        %643 = vmatmul.mubr.f32.gmra.mrb[0].mxu0 %v513
        %v644 = vpop.f32.mrb[0].mxu0
        %v645 = vadd.f32 %v483, %v644
        %v646 = vpop.f32.mrb[0].mxu0
        %647 = vmatprep.mubr.f32.mxu0 0.0
        %648 = vmatmul.mubr.f32.gmra.mrb[0].mxu0 %v516
        %v649 = vpop.f32.mrb[0].mxu0
        %v650 = vadd.f32 %v483, %v649
        %v651 = vpop.f32.mrb[0].mxu0
        %652 = vmatprep.mubr.f32.mxu0 0.0
        %653 = vmatmul.mubr.f32.gmra.mrb[0].mxu0 %v519
        %v654 = vpop.f32.mrb[0].mxu0
        %v655 = vadd.f32 %v483, %v654
        %v656 = vpop.f32.mrb[0].mxu0
        %657 = vmatprep.mubr.f32.mxu0 0.0
        %658 = vmatmul.mubr.f32.gmra.mrb[0].mxu0 %v522
        %v659 = vpop.f32.mrb[0].mxu0
        %v660 = vadd.f32 %v483, %v659
        %v661 = vpop.f32.mrb[0].mxu0
        %662 = vmatprep.mubr.f32.mxu0 0.0
        %663 = vmatmul.mubr.f32.gmra.mrb[0].mxu0 %v525
        %v664 = vpop.f32.mrb[0].mxu0
        %v665 = vadd.f32 %v483, %v664
        %v666 = vpop.f32.mrb[0].mxu0
        %667 = vmatprep.mubr.f32.mxu0 0.0
        %668 = vmatmul.mubr.f32.gmra.mrb[0].mxu0 %v528
        %v669 = vpop.f32.mrb[0].mxu0
        %v670 = vadd.f32 %v483, %v669
        %v671 = vpop.f32.mrb[0].mxu0
        %672 = vmatprep.mubr.f32.mxu0 0.0
        %673 = vmatmul.mubr.f32.gmra.mrb[0].mxu0 %v531
        %v674 = vpop.f32.mrb[0].mxu0
        %v675 = vadd.f32 %v483, %v674
        %v676 = vpop.f32.mrb[0].mxu0
        %677 = vdwg.mxu0
        %v678 = vtanh.pop %v600
        %v679 = vtanh.pop %v605
        %v680 = vtanh.pop %v610
        %v681 = vtanh.pop %v615
        %v682 = vtanh.pop %v620
        %v683 = vtanh.pop %v625
        %v684 = vtanh.pop %v630
        %v685 = vtanh.pop %v635
        %v686 = vtanh.pop %v640
        %v687 = vtanh.pop %v645
        %v688 = vtanh.pop %v650
        %v689 = vtanh.pop %v655
        %v690 = vtanh.pop %v660
        %v691 = vtanh.pop %v665
        %v692 = vtanh.pop %v670
        %v693 = vtanh.pop %v675
        %695 = vset.pattern.permute.xlu0 0
        %696 = vperm.xlu0 %695, %v265
        %v697 = vpop.permute.xlu0 %696
        %v700 = vsel %vm484, %v262, 0
        %v703 = vsel %vm484, %v678, 0
        %v706 = vsel %vm484, %v679, 0
        %v709 = vsel %vm484, %v680, 0
        %v712 = vsel %vm484, %v681, 0
        %v715 = vsel %vm484, %v682, 0
        %v718 = vsel %vm484, %v683, 0
        %v721 = vsel %vm484, %v684, 0
        %v724 = vsel %vm484, %v685, 0
        %v727 = vsel %vm484, %v686, 0
        %v730 = vsel %vm484, %v687, 0
        %v733 = vsel %vm484, %v688, 0
        %v736 = vsel %vm484, %v689, 0
        %v739 = vsel %vm484, %v690, 0
        %v742 = vsel %vm484, %v691, 0
        %v745 = vsel %vm484, %v692, 0
        %v748 = vsel %vm484, %v693, 0
        %750 = vmatprep.subr.mxu0 0.0
        %751 = vmatpush1.xpose.msra.mxu0 %v703
        %752 = vmatprep.subr.mxu0 0.0
        %753 = vmatpush1.xpose.msra.mxu0 %v706
        %754 = vmatprep.subr.mxu0 0.0
        %755 = vmatpush1.xpose.msra.mxu0 %v709
        %756 = vmatprep.subr.mxu0 0.0
        %757 = vmatpush1.xpose.msra.mxu0 %v712
        %758 = vmatprep.subr.mxu0 0.0
        %759 = vmatpush1.xpose.msra.mxu0 %v715
        %760 = vmatprep.subr.mxu0 0.0
        %761 = vmatpush1.xpose.msra.mxu0 %v718
        %762 = vmatprep.subr.mxu0 0.0
        %763 = vmatpush1.xpose.msra.mxu0 %v721
        %764 = vmatprep.subr.mxu0 0.0
        %765 = vmatpush1.xpose.msra.mxu0 %v724
        %766 = vmatprep.subr.mxu0 0.0
        %767 = vmatpush1.xpose.msra.mxu0 %v727
        %768 = vmatprep.subr.mxu0 0.0
        %769 = vmatpush1.xpose.msra.mxu0 %v730
        %770 = vmatprep.subr.mxu0 0.0
        %771 = vmatpush1.xpose.msra.mxu0 %v733
        %772 = vmatprep.subr.mxu0 0.0
        %773 = vmatpush1.xpose.msra.mxu0 %v736
        %774 = vmatprep.subr.mxu0 0.0
        %775 = vmatpush1.xpose.msra.mxu0 %v739
        %776 = vmatprep.subr.mxu0 0.0
        %777 = vmatpush1.xpose.msra.mxu0 %v742
        %778 = vmatprep.subr.mxu0 0.0
        %779 = vmatpush1.xpose.msra.mxu0 %v745
        %780 = vmatprep.subr.mxu0 0.0
        %781 = vmatpush1.xpose.msra.mxu0 %v748
        %782 = vmatprep.subr.mxu0 0.0
        %783 = vmatpush1.xpose.msra.mxu0 0.0
        %784 = vmatprep.subr.mxu0 0.0
        %785 = vmatpush1.xpose.msra.mxu0 0.0
        %786 = vmatprep.subr.mxu0 0.0
        %787 = vmatpush1.xpose.msra.mxu0 0.0
        %788 = vmatprep.subr.mxu0 0.0
        %789 = vmatpush1.xpose.msra.mxu0 0.0
        %790 = vmatprep.subr.mxu0 0.0
        %791 = vmatpush1.xpose.msra.mxu0 0.0
        %792 = vmatprep.subr.mxu0 0.0
        %793 = vmatpush1.xpose.msra.mxu0 0.0
        %794 = vmatprep.subr.mxu0 0.0
        %795 = vmatpush1.xpose.msra.mxu0 0.0
        %796 = vmatprep.subr.mxu0 0.0
        %797 = vmatpush1.xpose.msra.mxu0 0.0
        %798 = vmatprep.subr.mxu0 0.0
        %799 = vmatpush1.xpose.msra.mxu0 0.0
        %800 = vmatprep.subr.mxu0 0.0
        %801 = vmatpush1.xpose.msra.mxu0 0.0
        %802 = vmatprep.subr.mxu0 0.0
        %803 = vmatpush1.xpose.msra.mxu0 0.0
        %804 = vmatprep.subr.mxu0 0.0
        %805 = vmatpush1.xpose.msra.mxu0 0.0
        %806 = vmatprep.subr.mxu0 0.0
        %807 = vmatpush1.xpose.msra.mxu0 0.0
        %808 = vmatprep.subr.mxu0 0.0
        %809 = vmatpush1.xpose.msra.mxu0 0.0
        %810 = vmatprep.subr.mxu0 0.0
        %811 = vmatpush1.xpose.msra.mxu0 0.0
        %812 = vmatprep.subr.mxu0 0.0
        %813 = vmatpush1.xpose.msra.mxu0 0.0
        %814 = vmatprep.mubr.f32.mxu0 0.0
        %815 = vmatmul.mubr.f32.gmra.mrb[0].mxu0 %v700
        %v816 = vpop.f32.mrb[0].mxu0
        %v817 = vadd.f32 %v697, %v816
        %v818 = vpop.f32.mrb[0].mxu0
        %819 = vdwg.mxu0
        %vm820 = vcmask 1043456
        %v821 = vsel %vm820, %v817, -inf
        %v822 = vrot.slane %v821, 4
        %v823 = vmax.f32 %v821, %v822
        %v824 = vrot.slane %v823, 2
        %v825 = vmax.f32 %v823, %v824
        %v826 = vrot.slane %v825, 1
        %v827 = vmax.f32 %v825, %v826
        %v828 = vsub.f32 %v817, %v827
        %v829 = vmul.f32 %v828, 1.442695
        %v830 = vpow.pop %v829
        %v831 = vsel %vm820, %v830, 0.0
        %v832 = vrot.slane %v831, 4
        %v833 = vadd.f32 %v831, %v832
        %v834 = vrot.slane %v833, 2
        %v835 = vadd.f32 %v833, %v834
        %v836 = vrot.slane %v835, 1
        %v837 = vadd.f32 %v835, %v836
        %v838 = vlog2.pop %v837
        %v839 = vmul.f32 %v838, 0.6931472
        %v840 = vlaneseq
        %v841 = vshrl.u32 %v840, 7
        %vm842 = vcmp.eq.f32.partialorder %v817, %v827
        %v843 = vsel %vm842, %v841, 4
        %v844 = vsel %vm820, %v843, 2147483647
        %v845 = vrot.slane %v844, 4
        %vm846 = vcmp.lt.s32.totalorder %v844, %v845
        %v847 = vsel %vm846, %v844, %v845
        %v848 = vrot.slane %v847, 2
        %vm849 = vcmp.lt.s32.totalorder %v847, %v848
        %v850 = vsel %vm849, %v847, %v848
        %v851 = vrot.slane %v850, 1
        %vm852 = vcmp.lt.s32.totalorder %v850, %v851
        %v853 = vsel %vm852, %v850, %v851
        %854 = vst [vmem:[%s221 - $0x4] sm:$0x10] %v817
        %855 = vst [vmem:[%s227] sm:$0x1] %v853
        %v856 = vsub.f32 0.0, %v839
        %857 = vst [vmem:[%s233] sm:$0x1] %v856
        %s858 = sand.u32 %s99, 1
        %s859 = scalar_lea.sflag [#allocation3], %s858
        %s860 = sand.u32 %s99, 1
        %s861 = scalar_lea.vmem [#allocation2], %s860
        %s862 = sand.u32 %s23, 1
        %s863 = scalar_lea.sflag [#allocation5], %s862
        %s864 = sand.u32 %s125, 1
        %s865 = scalar_lea.vmem [#allocation4], %s864
        %s866 = sand.u32 %s23, 1
        %s867 = scalar_lea.sflag [#allocation5], %s866
        %s868 = sand.u32 %s151, 1
        %s869 = scalar_lea.vmem [#allocation6], %s868
        // Predicated region
        $region33: #{tpu_custom_call.1} parent=31 // pred_check
          %p870 = pneg %p109
        $region34: #{tpu_custom_call.1} parent=31 // pred_check_branch
          %872 = sbr.rel (%p870) target = $region36
        $region35: #{tpu_custom_call.1} parent=31 // pred_region
          %s874 = ssub.s32 16, 16
          %875 = vsyncadd %s859, %s874
          %s876 = smul.addr %s23, 16
          %s877 = scalar_lea.hbm %s3, %s876
          %s879 = sshll.u32 %s861, 4
          %s880 = int_to_ptr.vmem [resolvable:$true] %s879
          %882 = dma.vmem_to_hbm [thread:$0]  %s880, 16, %s877, %s859
        $region36: #{tpu_custom_call.1} parent=31 // pred_fallthru
          _
        // Predicated region
        $region37: #{tpu_custom_call.1} parent=31 // pred_check
          %p883 = pneg %p135
        $region38: #{tpu_custom_call.1} parent=31 // pred_check_branch
          %885 = sbr.rel (%p883) target = $region40
        $region39: #{tpu_custom_call.1} parent=31 // pred_region
          %s887 = ssub.s32 16, 16
          %888 = vsyncadd %s863, %s887
          %s889 = smul.addr %s23, 16
          %s890 = scalar_lea.hbm %s4, %s889
          %s892 = sshll.u32 %s865, 4
          %s893 = int_to_ptr.vmem [resolvable:$true] %s892
          %895 = dma.vmem_to_hbm [thread:$0]  %s893, 16, %s890, %s863
        $region40: #{tpu_custom_call.1} parent=31 // pred_fallthru
          _
        // Predicated region
        $region41: #{tpu_custom_call.1} parent=31 // pred_check
          %p896 = pneg %p161
        $region42: #{tpu_custom_call.1} parent=31 // pred_check_branch
          %898 = sbr.rel (%p896) target = $region44
        $region43: #{tpu_custom_call.1} parent=31 // pred_region
          %s900 = ssub.s32 16, 16
          %901 = vsyncadd %s867, %s900
          %s902 = smul.addr %s23, 16
          %s903 = scalar_lea.hbm %s5, %s902
          %s905 = sshll.u32 %s869, 4
          %s906 = int_to_ptr.vmem [resolvable:$true] %s905
          %908 = dma.vmem_to_hbm [thread:$0]  %s906, 16, %s903, %s867
        $region44: #{tpu_custom_call.1} parent=31 // pred_fallthru
          _
      $region32: #{tpu_custom_call.1} parent=5 // pred_fallthru
        _
      %p909 = scmp.le.s32.totalorder 2, %s18
      // Predicated region
      $region45: #{tpu_custom_call.1} parent=5 // pred_check
        %p910 = pneg %p909
      $region46: #{tpu_custom_call.1} parent=5 // pred_check_branch
        %912 = sbr.rel (%p910) target = $region48
      $region47: #{tpu_custom_call.1} parent=5 // pred_region
        %s913 = ssub.s32 %s18, 2
        // Predicated region
        $region49: #{tpu_custom_call.1} parent=47 // pred_check
          %p914 = pneg %p115
        $region50: #{tpu_custom_call.1} parent=47 // pred_check_branch
          %916 = sbr.rel (%p914) target = $region52
        $region51: #{tpu_custom_call.1} parent=47 // pred_region
          %s917 = sand.u32 %s100, 1
          %s918 = scalar_lea.sflag [#allocation3], %s917
          %s919 = sand.u32 %s100, 1
          %s920 = scalar_lea.vmem [#allocation2], %s919
          %921 = dma.done %s918, 16
        $region52: #{tpu_custom_call.1} parent=47 // pred_fallthru
          _
        // Predicated region
        $region53: #{tpu_custom_call.1} parent=47 // pred_check
          %p922 = pneg %p141
        $region54: #{tpu_custom_call.1} parent=47 // pred_check_branch
          %924 = sbr.rel (%p922) target = $region56
        $region55: #{tpu_custom_call.1} parent=47 // pred_region
          %s925 = sand.u32 %s24, 1
          %s926 = scalar_lea.sflag [#allocation5], %s925
          %s927 = sand.u32 %s126, 1
          %s928 = scalar_lea.vmem [#allocation4], %s927
          %929 = dma.done %s926, 16
        $region56: #{tpu_custom_call.1} parent=47 // pred_fallthru
          _
        // Predicated region
        $region57: #{tpu_custom_call.1} parent=47 // pred_check
          %p930 = pneg %p167
        $region58: #{tpu_custom_call.1} parent=47 // pred_check_branch
          %932 = sbr.rel (%p930) target = $region60
        $region59: #{tpu_custom_call.1} parent=47 // pred_region
          %s933 = sand.u32 %s24, 1
          %s934 = scalar_lea.sflag [#allocation5], %s933
          %s935 = sand.u32 %s152, 1
          %s936 = scalar_lea.vmem [#allocation6], %s935
          %937 = dma.done %s934, 16
        $region60: #{tpu_custom_call.1} parent=47 // pred_fallthru
          _
      $region48: #{tpu_custom_call.1} parent=5 // pred_fallthru
        _
    $region6: #{tpu_custom_call.1} parent=1 // loop_footer
      %s22 = sadd.s32 1, %s18
    $region7: #{tpu_custom_call.1} parent=1 // loop_footer_branch
      %17 = sbr.rel target = $region3
    $region8: #{tpu_custom_call.1} parent=1 // loop_exit
      _
    %938 = vsyncpa [#allocation3], 1
    %s939 = scalar_lea.sflag [#allocation3], 1
    %940 = vsyncpa %s939, 1
    %941 = vsyncpa [#allocation5], 1
    %s942 = scalar_lea.sflag [#allocation5], 1
    %943 = vsyncpa %s942, 1

</llo_original>
